<compile_context>
chip_gen: v7x
topology: tpu7x:2x2x1
jax: 0.10.0
libtpu: 0.0.40
codegen_flags: <defaults>
</compile_context>

<pallas_src>
import jax
import jax.numpy as jnp
from jax.experimental import pallas as pl
from jax.experimental.pallas import tpu as pltpu

NEG_SLOPE = 0.01          # F.leaky_relu default negative_slope
MAX_TILE_B = 4096         # default batch tile for large B (perf-review sweet spot)
_MIB = 1024 * 1024


def _leaky_relu(x):
    return jnp.where(x > 0, x, NEG_SLOPE * x)


def actor_kernel(x_ref, w1_ref, w2_ref, w3_ref, b1_ref, b2_ref, b3_ref, out_ref):
    # Shapes (per grid step):
    #   x_ref  : (TILE_B, S)                (f32 in HBM; cast in-kernel if bf16 MXU path)
    #   w1_ref : (S, H1)  w2_ref : (H1, H2)  w3_ref : (H2, A)   (resident)
    #   b*_ref : (1, H1) / (1, H2) / (1, A)                     (resident, f32)
    #   out_ref: (TILE_B, A)
    mxu_dtype = w1_ref.dtype                     # f32 or bf16 MXU operands; acc is f32
    x = x_ref[...].astype(mxu_dtype)             # in-kernel cast: VPU op hidden under slack

    h1 = jnp.dot(x, w1_ref[...], preferred_element_type=jnp.float32) + b1_ref[...]
    h1 = _leaky_relu(h1)

    h2 = jnp.dot(h1.astype(mxu_dtype), w2_ref[...],
                 preferred_element_type=jnp.float32) + b2_ref[...]
    h2 = _leaky_relu(h2)

    logits = jnp.dot(h2.astype(mxu_dtype), w3_ref[...],
                     preferred_element_type=jnp.float32) + b3_ref[...]

    # Numerically stable softmax along the last axis (softmax_dim=-1).
    m = jnp.max(logits, axis=-1, keepdims=True)
    e = jnp.exp(logits - m)
    denom = jnp.sum(e, axis=-1, keepdims=True)
    # EUP approximate reciprocal + one Newton-Raphson step (VPU muls) instead
    # of a vector divide; keeps ~f32-level accuracy.
    inv = pl.reciprocal(denom, approx=True)
    inv = inv * (2.0 - denom * inv)
    out_ref[...] = e * inv


def actor_reference(x, p):
    """Plain-JAX reference (also the fused-XLA small-batch fast path)."""
    h1 = _leaky_relu(x @ p["w1"] + p["b1"])
    h2 = _leaky_relu(h1 @ p["w2"] + p["b2"])
    logits = h2 @ p["w3"] + p["b3"]
    return jax.nn.softmax(logits, axis=-1)


def actor_forward(x, params, *, tile_b=None, use_bf16=False,
                  small_batch_fallback=True, small_batch_threshold=256):
    """params: dict with w1 (S,64), b1 (64,), w2 (64,32), b2 (32,), w3 (32,A), b3 (A,)."""
    B, S = x.shape
    H1 = params["w1"].shape[1]
    H2 = params["w2"].shape[1]
    A = params["w3"].shape[1]

    # For tiny batches a Pallas launch can never amortize its fixed latency;
    # XLA fuses this 13 KB MLP into a couple of ops.
    if small_batch_fallback and B <= small_batch_threshold:
        return actor_reference(x.astype(jnp.float32), params)

    # Batch tile selection:
    #  * B <= MAX_TILE_B  -> single full-size block (always layout-legal).
    #  * else             -> MAX_TILE_B-row tiles (multiple of 8); Pallas
    #                        handles the partial edge block, no wrapper pad.
    if tile_b is None:
        tile_b = B if B <= MAX_TILE_B else MAX_TILE_B
    tile_b = min(tile_b, B)
    if tile_b != B and tile_b % 8 != 0:
        tile_b = min(B, ((tile_b + 7) // 8) * 8)

    grid = (pl.cdiv(B, tile_b),)

    # VMEM budget: every buffer here is narrow (S=16, H1=64, H2=32, A=8) so the
    # last dim is padded to 128 lanes -> ~4 KiB of VMEM per batch row across
    # double-buffered x/out plus intermediates.  Clamp to <= 56 MiB (safe on
    # v7x's 64 MiB physical VMEM; v5e/v6e have 128 MiB).
    est = tile_b * 4096 * 3 // 2 + 2 * _MIB
    vmem_limit = int(min(56 * _MIB, max(32 * _MIB, est)))

    w1, w2, w3 = params["w1"], params["w2"], params["w3"]
    if use_bf16:
        # Only the (tiny, resident) weights are cast in the wrapper; x is cast
        # inside the kernel so we never add an extra HBM pass over the input.
        w1 = w1.astype(jnp.bfloat16)
        w2 = w2.astype(jnp.bfloat16)
        w3 = w3.astype(jnp.bfloat16)

    b1 = params["b1"].reshape(1, H1).astype(jnp.float32)
    b2 = params["b2"].reshape(1, H2).astype(jnp.float32)
    b3 = params["b3"].reshape(1, A).astype(jnp.float32)

    out = pl.pallas_call(
        actor_kernel,
        out_shape=jax.ShapeDtypeStruct((B, A), jnp.float32),
        grid=grid,
        in_specs=[
            pl.BlockSpec((tile_b, S), lambda i: (i, 0)),   # x: streamed per batch tile
            pl.BlockSpec((S, H1), lambda i: (0, 0)),       # weights: resident across steps
            pl.BlockSpec((H1, H2), lambda i: (0, 0)),
            pl.BlockSpec((H2, A), lambda i: (0, 0)),
            pl.BlockSpec((1, H1), lambda i: (0, 0)),       # biases: three resident refs
            pl.BlockSpec((1, H2), lambda i: (0, 0)),
            pl.BlockSpec((1, A), lambda i: (0, 0)),
        ],
        out_specs=pl.BlockSpec((tile_b, A), lambda i: (i, 0)),
        compiler_params=pltpu.CompilerParams(
            dimension_semantics=("parallel",),   # shard batch tiles across TCs (v7x)
            vmem_limit_bytes=vmem_limit,
        ),
    )(x.astype(jnp.float32), w1, w2, w3, b1, b2, b3)
    return out


def init_params(key, state_dim, action_dim):
    """Deterministic synthetic init (PyTorch-like uniform fan-in scaling)."""
    ks = jax.random.split(key, 6)

    def lin(kw, kb, fan_in, fan_out):
        bound = 1.0 / jnp.sqrt(fan_in)
        w = jax.random.uniform(kw, (fan_in, fan_out), jnp.float32, -bound, bound)
        b = jax.random.uniform(kb, (fan_out,), jnp.float32, -bound, bound)
        return w, b

    w1, b1 = lin(ks[0], ks[1], state_dim, 64)
    w2, b2 = lin(ks[2], ks[3], 64, 32)
    w3, b3 = lin(ks[4], ks[5], 32, action_dim)
    return {"w1": w1, "b1": b1, "w2": w2, "b2": b2, "w3": w3, "b3": b3}


if __name__ == "__main__":
    key = jax.random.PRNGKey(0)
    k_x, k_p, k_med, k_big = jax.random.split(key, 4)

    batch, state_dim, action_dim = 8, 16, 8
    x = jax.random.normal(k_x, (batch, state_dim), jnp.float32)
    params = init_params(k_p, state_dim, action_dim)

    # --- small batch: force the Pallas path (single full-size block) ---
    prob = actor_forward(x, params, small_batch_fallback=False)
    jax.block_until_ready(prob)
    ref = actor_reference(x, params)
    assert prob.shape == (batch, action_dim)
    assert jnp.allclose(prob, ref, atol=1e-4, rtol=1e-4)
    assert jnp.allclose(jnp.sum(prob, axis=-1), 1.0, atol=1e-4)

    # --- default dispatch for tiny batches uses the fused-XLA fast path ---
    prob_xla = actor_forward(x, params)
    assert jnp.allclose(prob_xla, ref, atol=1e-5, rtol=1e-5)

    # --- medium batch (not a multiple of 8): single full-size block, no pad/slice ---
    b_med = 300
    x_med = jax.random.normal(k_med, (b_med, state_dim), jnp.float32)
    prob_med = actor_forward(x_med, params, small_batch_fallback=False)
    jax.block_until_ready(prob_med)
    ref_med = actor_reference(x_med, params)
    assert prob_med.shape == (b_med, action_dim)
    assert jnp.allclose(prob_med, ref_med, atol=1e-4, rtol=1e-4)
    assert jnp.allclose(jnp.sum(prob_med, axis=-1), 1.0, atol=1e-4)

    # --- larger batch: multi-step grid with a partial edge block ---
    b_big = 5000
    x_big = jax.random.normal(k_big, (b_big, state_dim), jnp.float32)
    prob_big = actor_forward(x_big, params, tile_b=2048)   # grid=3, last block partial
    jax.block_until_ready(prob_big)
    ref_big = actor_reference(x_big, params)
    assert prob_big.shape == (b_big, action_dim)
    assert jnp.allclose(prob_big, ref_big, atol=1e-4, rtol=1e-4)
    assert jnp.allclose(jnp.sum(prob_big, axis=-1), 1.0, atol=1e-4)

    # --- bf16 MXU-operand path (weights cast in wrapper, x cast in-kernel) ---
    prob_bf16 = actor_forward(x_big, params, use_bf16=True)
    jax.block_until_ready(prob_bf16)
    assert jnp.allclose(prob_bf16, ref_big, atol=2e-2, rtol=5e-2)
    assert jnp.allclose(jnp.sum(prob_bf16, axis=-1), 1.0, atol=2e-2)

    print("KERNEL_OK")
</pallas_src>

<mosaic_0001>
module attributes {stable_mosaic.version = 11 : i64} {
  func.func @actor_kernel(%arg0: i32, %arg1: memref<8x16xf32, #tpu.memory_space<vmem>>, %arg2: memref<16x64xf32, #tpu.memory_space<vmem>>, %arg3: memref<64x32xf32, #tpu.memory_space<vmem>>, %arg4: memref<32x8xf32, #tpu.memory_space<vmem>>, %arg5: memref<1x64xf32, #tpu.memory_space<vmem>>, %arg6: memref<1x32xf32, #tpu.memory_space<vmem>>, %arg7: memref<1x8xf32, #tpu.memory_space<vmem>>, %arg8: memref<8x8xf32, #tpu.memory_space<vmem>>) attributes {dimension_semantics = [#tpu.dimension_semantics<parallel>], iteration_bounds = array<i64: 1>, scalar_prefetch = 0 : i64, scratch_operands = 0 : i64, tpu.core_type = #tpu.core_type<tc>, window_params = [{transform_indices = @transform_0, window_bounds = array<i64: 8, 16>}, {pipeline_mode = #tpu.pipeline_mode<synchronous>, transform_indices = @transform_1, window_bounds = array<i64: 16, 64>}, {pipeline_mode = #tpu.pipeline_mode<synchronous>, transform_indices = @transform_2, window_bounds = array<i64: 64, 32>}, {pipeline_mode = #tpu.pipeline_mode<synchronous>, transform_indices = @transform_3, window_bounds = array<i64: 32, 8>}, {pipeline_mode = #tpu.pipeline_mode<synchronous>, transform_indices = @transform_4, window_bounds = array<i64: 1, 64>}, {pipeline_mode = #tpu.pipeline_mode<synchronous>, transform_indices = @transform_5, window_bounds = array<i64: 1, 32>}, {pipeline_mode = #tpu.pipeline_mode<synchronous>, transform_indices = @transform_6, window_bounds = array<i64: 1, 8>}, {transform_indices = @transform_7, window_bounds = array<i64: 8, 8>}]} {
    %c0 = arith.constant 0 : index
    %c0_0 = arith.constant 0 : index
    %0 = vector.load %arg1[%c0, %c0_0] : memref<8x16xf32, #tpu.memory_space<vmem>>, vector<8x16xf32>
    %c0_1 = arith.constant 0 : index
    %c0_2 = arith.constant 0 : index
    %1 = vector.load %arg2[%c0_1, %c0_2] : memref<16x64xf32, #tpu.memory_space<vmem>>, vector<16x64xf32>
    %cst = arith.constant dense<0.000000e+00> : vector<8x64xf32>
    %2 = tpu.matmul %0, %1, %cst {dimension_numbers = #tpu.dot_dimension_numbers<[1], [0], [0], [1], [0, 0, 1, 1], [], []>} : vector<8x16xf32>, vector<16x64xf32>, vector<8x64xf32> -> vector<8x64xf32>
    %c0_3 = arith.constant 0 : index
    %c0_4 = arith.constant 0 : index
    %3 = vector.load %arg5[%c0_3, %c0_4] : memref<1x64xf32, #tpu.memory_space<vmem>>, vector<1x64xf32>
    %4 = vector.broadcast %3 : vector<1x64xf32> to vector<8x64xf32>
    %5 = arith.addf %2, %4 : vector<8x64xf32>
    %cst_5 = arith.constant 0.000000e+00 : f32
    %6 = vector.broadcast %cst_5 : f32 to vector<8x64xf32>
    %7 = arith.cmpf ogt, %5, %6 : vector<8x64xf32>
    %cst_6 = arith.constant 0.00999999977 : f32
    %8 = vector.broadcast %cst_6 : f32 to vector<8x64xf32>
    %9 = arith.mulf %8, %5 : vector<8x64xf32>
    %10 = arith.select %7, %5, %9 : vector<8x64xi1>, vector<8x64xf32>
    %c0_7 = arith.constant 0 : index
    %c0_8 = arith.constant 0 : index
    %11 = vector.load %arg3[%c0_7, %c0_8] : memref<64x32xf32, #tpu.memory_space<vmem>>, vector<64x32xf32>
    %cst_9 = arith.constant dense<0.000000e+00> : vector<8x32xf32>
    %12 = tpu.matmul %10, %11, %cst_9 {dimension_numbers = #tpu.dot_dimension_numbers<[1], [0], [0], [1], [0, 0, 1, 1], [], []>} : vector<8x64xf32>, vector<64x32xf32>, vector<8x32xf32> -> vector<8x32xf32>
    %c0_10 = arith.constant 0 : index
    %c0_11 = arith.constant 0 : index
    %13 = vector.load %arg6[%c0_10, %c0_11] : memref<1x32xf32, #tpu.memory_space<vmem>>, vector<1x32xf32>
    %14 = vector.broadcast %13 : vector<1x32xf32> to vector<8x32xf32>
    %15 = arith.addf %12, %14 : vector<8x32xf32>
    %cst_12 = arith.constant 0.000000e+00 : f32
    %16 = vector.broadcast %cst_12 : f32 to vector<8x32xf32>
    %17 = arith.cmpf ogt, %15, %16 : vector<8x32xf32>
    %cst_13 = arith.constant 0.00999999977 : f32
    %18 = vector.broadcast %cst_13 : f32 to vector<8x32xf32>
    %19 = arith.mulf %18, %15 : vector<8x32xf32>
    %20 = arith.select %17, %15, %19 : vector<8x32xi1>, vector<8x32xf32>
    %c0_14 = arith.constant 0 : index
    %c0_15 = arith.constant 0 : index
    %21 = vector.load %arg4[%c0_14, %c0_15] : memref<32x8xf32, #tpu.memory_space<vmem>>, vector<32x8xf32>
    %cst_16 = arith.constant dense<0.000000e+00> : vector<8x8xf32>
    %22 = tpu.matmul %20, %21, %cst_16 {dimension_numbers = #tpu.dot_dimension_numbers<[1], [0], [0], [1], [0, 0, 1, 1], [], []>} : vector<8x32xf32>, vector<32x8xf32>, vector<8x8xf32> -> vector<8x8xf32>
    %c0_17 = arith.constant 0 : index
    %c0_18 = arith.constant 0 : index
    %23 = vector.load %arg7[%c0_17, %c0_18] : memref<1x8xf32, #tpu.memory_space<vmem>>, vector<1x8xf32>
    %24 = vector.broadcast %23 : vector<1x8xf32> to vector<8x8xf32>
    %25 = arith.addf %22, %24 : vector<8x8xf32>
    %cst_19 = arith.constant dense<0xFF800000> : vector<8xf32>
    %26 = vector.multi_reduction <maximumf>, %25, %cst_19 [1] : vector<8x8xf32> to vector<8xf32>
    %27 = vector.shape_cast %26 : vector<8xf32> to vector<8x1xf32>
    %28 = vector.broadcast %27 : vector<8x1xf32> to vector<8x8xf32>
    %29 = arith.subf %25, %28 : vector<8x8xf32>
    %30 = math.exp %29 : vector<8x8xf32>
    %cst_20 = arith.constant dense<0.000000e+00> : vector<8xf32>
    %31 = vector.multi_reduction <add>, %30, %cst_20 [1] : vector<8x8xf32> to vector<8xf32>
    %32 = vector.shape_cast %31 : vector<8xf32> to vector<8x1xf32>
    %33 = tpu.reciprocal %32 {approx = true} : vector<8x1xf32> -> vector<8x1xf32>
    %34 = arith.mulf %32, %33 : vector<8x1xf32>
    %cst_21 = arith.constant 2.000000e+00 : f32
    %35 = vector.broadcast %cst_21 : f32 to vector<8x1xf32>
    %36 = arith.subf %35, %34 : vector<8x1xf32>
    %37 = arith.mulf %33, %36 : vector<8x1xf32>
    %38 = vector.broadcast %37 : vector<8x1xf32> to vector<8x8xf32>
    %39 = arith.mulf %30, %38 : vector<8x8xf32>
    %c0_22 = arith.constant 0 : index
    %c0_23 = arith.constant 0 : index
    %40 = vector.load %arg8[%c0_22, %c0_23] : memref<8x8xf32, #tpu.memory_space<vmem>>, vector<8x8xf32>
    tpu.vector_store %arg8[%c0_22, %c0_23], %39 {strides = array<i32>} : memref<8x8xf32, #tpu.memory_space<vmem>>, vector<8x8xf32>,
    return
  }
  func.func @transform_0(%arg0: i32) -> (i32, i32) {
    %c0_i32 = arith.constant 0 : i32
    %c0_i32_0 = arith.constant 0 : i32
    return %arg0, %c0_i32 : i32, i32
  }
  func.func @transform_1(%arg0: i32) -> (i32, i32) {
    %c0_i32 = arith.constant 0 : i32
    %c0_i32_0 = arith.constant 0 : i32
    %c0_i32_1 = arith.constant 0 : i32
    return %c0_i32, %c0_i32_0 : i32, i32
  }
  func.func @transform_2(%arg0: i32) -> (i32, i32) {
    %c0_i32 = arith.constant 0 : i32
    %c0_i32_0 = arith.constant 0 : i32
    %c0_i32_1 = arith.constant 0 : i32
    return %c0_i32, %c0_i32_0 : i32, i32
  }
  func.func @transform_3(%arg0: i32) -> (i32, i32) {
    %c0_i32 = arith.constant 0 : i32
    %c0_i32_0 = arith.constant 0 : i32
    %c0_i32_1 = arith.constant 0 : i32
    return %c0_i32, %c0_i32_0 : i32, i32
  }
  func.func @transform_4(%arg0: i32) -> (i32, i32) {
    %c0_i32 = arith.constant 0 : i32
    %c0_i32_0 = arith.constant 0 : i32
    %c0_i32_1 = arith.constant 0 : i32
    return %c0_i32, %c0_i32_0 : i32, i32
  }
  func.func @transform_5(%arg0: i32) -> (i32, i32) {
    %c0_i32 = arith.constant 0 : i32
    %c0_i32_0 = arith.constant 0 : i32
    %c0_i32_1 = arith.constant 0 : i32
    return %c0_i32, %c0_i32_0 : i32, i32
  }
  func.func @transform_6(%arg0: i32) -> (i32, i32) {
    %c0_i32 = arith.constant 0 : i32
    %c0_i32_0 = arith.constant 0 : i32
    %c0_i32_1 = arith.constant 0 : i32
    return %c0_i32, %c0_i32_0 : i32, i32
  }
  func.func @transform_7(%arg0: i32) -> (i32, i32) {
    %c0_i32 = arith.constant 0 : i32
    %c0_i32_0 = arith.constant 0 : i32
    return %arg0, %c0_i32 : i32, i32
  }
}

</mosaic_0001>

<llo_original>
// kernel: tpu_custom_call.1
$region0: #{tpu_custom_call.1}
  #allocation0 [shape = 'u32[]', space=smem, size = 0x4, offset = 0x4, fixed_abs, tag = 'smem constant byte address 0x4 - core index']
  #allocation1 [shape = 'u32[144,128]{1,0:T(1,128)}', space=vmem, size = 0x12000, scoped, tag = 'internal scratch']
  %s0 = inlined_call_operand.vmem [shape: f32[8,16], index: 0, kind: input, shape index: {}]
  %s1 = inlined_call_operand.vmem [shape: f32[16,64], index: 1, kind: input, shape index: {}]
  %s2 = inlined_call_operand.vmem [shape: f32[64,32], index: 2, kind: input, shape index: {}]
  %s3 = inlined_call_operand.vmem [shape: f32[32,8], index: 3, kind: input, shape index: {}]
  %s4 = inlined_call_operand.vmem [shape: f32[1,64], index: 4, kind: input, shape index: {}]
  %s5 = inlined_call_operand.vmem [shape: f32[1,32], index: 5, kind: input, shape index: {}]
  %s6 = inlined_call_operand.vmem [shape: f32[1,8], index: 6, kind: input, shape index: {}]
  %s7 = inlined_call_operand.hbm [shape: f32[8,8], index: 7, kind: output, shape index: {}]
  %s8 = sld [smem:[#allocation0]]
  $region38: #{tpu_custom_call.1} parent=0
    _
  %s10 = ssub.s32 1, %s8
  %s11 = scalar_select 0, %s10, %s8
  $region1: #{tpu_custom_call.1} parent=0
    #allocation2 [shape = 'u8[4096]{0}', space=vmem, size = 0x1000, scoped, tag = 'output window, operand 0, single buffered']
    #allocation3 [shape = 's32[1]{0}', space=sflag, size = 0x4, scoped, tag = 'scoped memory for tpu_custom_call.1']
    %12 = vsyncpa [#allocation3], 0
    // Predicated region
    $region2: #{tpu_custom_call.1} parent=1 // pred_check
      _
    $region3: #{tpu_custom_call.1} parent=1 // pred_check_branch
      %14 = sbr.rel (0) target = $region5
    $region4: #{tpu_custom_call.1} parent=1 // pred_region
      _
    $region5: #{tpu_custom_call.1} parent=1 // pred_fallthru
      _
    // Predicated region
    $region6: #{tpu_custom_call.1} parent=1 // pred_check
      _
    $region7: #{tpu_custom_call.1} parent=1 // pred_check_branch
      %16 = sbr.rel (0) target = $region9
    $region8: #{tpu_custom_call.1} parent=1 // pred_region
      _
    $region9: #{tpu_custom_call.1} parent=1 // pred_fallthru
      _
    // Predicated region
    $region10: #{tpu_custom_call.1} parent=1 // pred_check
      _
    $region11: #{tpu_custom_call.1} parent=1 // pred_check_branch
      %18 = sbr.rel (0) target = $region13
    $region12: #{tpu_custom_call.1} parent=1 // pred_region
      _
    $region13: #{tpu_custom_call.1} parent=1 // pred_fallthru
      _
    // Predicated region
    $region14: #{tpu_custom_call.1} parent=1 // pred_check
      _
    $region15: #{tpu_custom_call.1} parent=1 // pred_check_branch
      %20 = sbr.rel (0) target = $region17
    $region16: #{tpu_custom_call.1} parent=1 // pred_region
      _
    $region17: #{tpu_custom_call.1} parent=1 // pred_fallthru
      _
    // Predicated region
    $region18: #{tpu_custom_call.1} parent=1 // pred_check
      _
    $region19: #{tpu_custom_call.1} parent=1 // pred_check_branch
      %22 = sbr.rel (0) target = $region21
    $region20: #{tpu_custom_call.1} parent=1 // pred_region
      _
    $region21: #{tpu_custom_call.1} parent=1 // pred_fallthru
      _
    // Predicated region
    $region22: #{tpu_custom_call.1} parent=1 // pred_check
      _
    $region23: #{tpu_custom_call.1} parent=1 // pred_check_branch
      %24 = sbr.rel (0) target = $region25
    $region24: #{tpu_custom_call.1} parent=1 // pred_region
      _
    $region25: #{tpu_custom_call.1} parent=1 // pred_fallthru
      _
    // Predicated region
    $region26: #{tpu_custom_call.1} parent=1 // pred_check
      _
    $region27: #{tpu_custom_call.1} parent=1 // pred_check_branch
      %26 = sbr.rel (0) target = $region29
    $region28: #{tpu_custom_call.1} parent=1 // pred_region
      _
    $region29: #{tpu_custom_call.1} parent=1 // pred_fallthru
      _
    %v27 = vld [vmem:[%s0] sm:$0xff]
    %v28 = vld [vmem:[%s1] sm:$0xff]
    %v29 = vld [vmem:[%s1 + $0x8] sm:$0xff]
    %v30 = vld [vmem:[%s4] sm:$0x1]
    %v32 = vlaneseq
    %v33 = vshrl.u32 %v32, 7
    %v34 = vsub.s32 0, %v33
    %v35 = vrot.slane %v30, %v34
    %vm37 = vcmask 130048
    %v39 = vsel %vm37, %v27, 0
    %41 = vmatprep.subr.mxu0 0.0
    %42 = vmatpush1.msra.mxu0 %v28
    %43 = vmatprep.subr.mxu0 0.0
    %44 = vmatpush1.msra.mxu0 %v29
    %45 = vmatprep.subr.mxu0 0.0
    %46 = vmatpush1.msra.mxu0 0.0
    %47 = vmatprep.subr.mxu0 0.0
    %48 = vmatpush1.msra.mxu0 0.0
    %49 = vmatprep.subr.mxu0 0.0
    %50 = vmatpush1.msra.mxu0 0.0
    %51 = vmatprep.subr.mxu0 0.0
    %52 = vmatpush1.msra.mxu0 0.0
    %53 = vmatprep.subr.mxu0 0.0
    %54 = vmatpush1.msra.mxu0 0.0
    %55 = vmatprep.subr.mxu0 0.0
    %56 = vmatpush1.msra.mxu0 0.0
    %57 = vmatprep.subr.mxu0 0.0
    %58 = vmatpush1.msra.mxu0 0.0
    %59 = vmatprep.subr.mxu0 0.0
    %60 = vmatpush1.msra.mxu0 0.0
    %61 = vmatprep.subr.mxu0 0.0
    %62 = vmatpush1.msra.mxu0 0.0
    %63 = vmatprep.subr.mxu0 0.0
    %64 = vmatpush1.msra.mxu0 0.0
    %65 = vmatprep.subr.mxu0 0.0
    %66 = vmatpush1.msra.mxu0 0.0
    %67 = vmatprep.subr.mxu0 0.0
    %68 = vmatpush1.msra.mxu0 0.0
    %69 = vmatprep.subr.mxu0 0.0
    %70 = vmatpush1.msra.mxu0 0.0
    %71 = vmatprep.subr.mxu0 0.0
    %72 = vmatpush1.msra.mxu0 0.0
    %73 = vmatprep.subr.mxu0 0.0
    %74 = vmatpush1.msra.mxu0 0.0
    %75 = vmatprep.subr.mxu0 0.0
    %76 = vmatpush1.msra.mxu0 0.0
    %77 = vmatprep.subr.mxu0 0.0
    %78 = vmatpush1.msra.mxu0 0.0
    %79 = vmatprep.subr.mxu0 0.0
    %80 = vmatpush1.msra.mxu0 0.0
    %81 = vmatprep.subr.mxu0 0.0
    %82 = vmatpush1.msra.mxu0 0.0
    %83 = vmatprep.subr.mxu0 0.0
    %84 = vmatpush1.msra.mxu0 0.0
    %85 = vmatprep.subr.mxu0 0.0
    %86 = vmatpush1.msra.mxu0 0.0
    %87 = vmatprep.subr.mxu0 0.0
    %88 = vmatpush1.msra.mxu0 0.0
    %89 = vmatprep.subr.mxu0 0.0
    %90 = vmatpush1.msra.mxu0 0.0
    %91 = vmatprep.subr.mxu0 0.0
    %92 = vmatpush1.msra.mxu0 0.0
    %93 = vmatprep.subr.mxu0 0.0
    %94 = vmatpush1.msra.mxu0 0.0
    %95 = vmatprep.subr.mxu0 0.0
    %96 = vmatpush1.msra.mxu0 0.0
    %97 = vmatprep.subr.mxu0 0.0
    %98 = vmatpush1.msra.mxu0 0.0
    %99 = vmatprep.subr.mxu0 0.0
    %100 = vmatpush1.msra.mxu0 0.0
    %101 = vmatprep.subr.mxu0 0.0
    %102 = vmatpush1.msra.mxu0 0.0
    %103 = vmatprep.subr.mxu0 0.0
    %104 = vmatpush1.msra.mxu0 0.0
    %105 = vmatprep.mubr.f32.mxu0 0.0
    %106 = vmatmul.mubr.f32.gmra.mrb[0].mxu0 %v39
    %v107 = vpop.f32.mrb[0].mxu0
    %v108 = vadd.f32 %v35, %v107
    %v109 = vpop.f32.mrb[0].mxu0
    %110 = vdwg.mxu0
    %vm111 = vcmp.gt.f32.partialorder %v108, 0.0
    %v112 = vmul.f32 %v108, 0.01
    %v113 = vsel %vm111, %v108, %v112
    %v114 = vld [vmem:[%s2] sm:$0xff]
    %v115 = vld [vmem:[%s2 + $0x8] sm:$0xff]
    %v116 = vld [vmem:[%s2 + $0x10] sm:$0xff]
    %v117 = vld [vmem:[%s2 + $0x18] sm:$0xff]
    %v118 = vld [vmem:[%s2 + $0x20] sm:$0xff]
    %v119 = vld [vmem:[%s2 + $0x28] sm:$0xff]
    %v120 = vld [vmem:[%s2 + $0x30] sm:$0xff]
    %v121 = vld [vmem:[%s2 + $0x38] sm:$0xff]
    %v122 = vld [vmem:[%s5] sm:$0x1]
    %v124 = vlaneseq
    %v125 = vshrl.u32 %v124, 7
    %v126 = vsub.s32 0, %v125
    %v127 = vrot.slane %v122, %v126
    %vm129 = vcmask 523264
    %v131 = vsel %vm129, %v113, 0
    %133 = vmatprep.subr.mxu0 0.0
    %134 = vmatpush1.msra.mxu0 %v114
    %135 = vmatprep.subr.mxu0 0.0
    %136 = vmatpush1.msra.mxu0 %v115
    %137 = vmatprep.subr.mxu0 0.0
    %138 = vmatpush1.msra.mxu0 %v116
    %139 = vmatprep.subr.mxu0 0.0
    %140 = vmatpush1.msra.mxu0 %v117
    %141 = vmatprep.subr.mxu0 0.0
    %142 = vmatpush1.msra.mxu0 %v118
    %143 = vmatprep.subr.mxu0 0.0
    %144 = vmatpush1.msra.mxu0 %v119
    %145 = vmatprep.subr.mxu0 0.0
    %146 = vmatpush1.msra.mxu0 %v120
    %147 = vmatprep.subr.mxu0 0.0
    %148 = vmatpush1.msra.mxu0 %v121
    %149 = vmatprep.subr.mxu0 0.0
    %150 = vmatpush1.msra.mxu0 0.0
    %151 = vmatprep.subr.mxu0 0.0
    %152 = vmatpush1.msra.mxu0 0.0
    %153 = vmatprep.subr.mxu0 0.0
    %154 = vmatpush1.msra.mxu0 0.0
    %155 = vmatprep.subr.mxu0 0.0
    %156 = vmatpush1.msra.mxu0 0.0
    %157 = vmatprep.subr.mxu0 0.0
    %158 = vmatpush1.msra.mxu0 0.0
    %159 = vmatprep.subr.mxu0 0.0
    %160 = vmatpush1.msra.mxu0 0.0
    %161 = vmatprep.subr.mxu0 0.0
    %162 = vmatpush1.msra.mxu0 0.0
    %163 = vmatprep.subr.mxu0 0.0
    %164 = vmatpush1.msra.mxu0 0.0
    %165 = vmatprep.subr.mxu0 0.0
    %166 = vmatpush1.msra.mxu0 0.0
    %167 = vmatprep.subr.mxu0 0.0
    %168 = vmatpush1.msra.mxu0 0.0
    %169 = vmatprep.subr.mxu0 0.0
    %170 = vmatpush1.msra.mxu0 0.0
    %171 = vmatprep.subr.mxu0 0.0
    %172 = vmatpush1.msra.mxu0 0.0
    %173 = vmatprep.subr.mxu0 0.0
    %174 = vmatpush1.msra.mxu0 0.0
    %175 = vmatprep.subr.mxu0 0.0
    %176 = vmatpush1.msra.mxu0 0.0
    %177 = vmatprep.subr.mxu0 0.0
    %178 = vmatpush1.msra.mxu0 0.0
    %179 = vmatprep.subr.mxu0 0.0
    %180 = vmatpush1.msra.mxu0 0.0
    %181 = vmatprep.subr.mxu0 0.0
    %182 = vmatpush1.msra.mxu0 0.0
    %183 = vmatprep.subr.mxu0 0.0
    %184 = vmatpush1.msra.mxu0 0.0
    %185 = vmatprep.subr.mxu0 0.0
    %186 = vmatpush1.msra.mxu0 0.0
    %187 = vmatprep.subr.mxu0 0.0
    %188 = vmatpush1.msra.mxu0 0.0
    %189 = vmatprep.subr.mxu0 0.0
    %190 = vmatpush1.msra.mxu0 0.0
    %191 = vmatprep.subr.mxu0 0.0
    %192 = vmatpush1.msra.mxu0 0.0
    %193 = vmatprep.subr.mxu0 0.0
    %194 = vmatpush1.msra.mxu0 0.0
    %195 = vmatprep.subr.mxu0 0.0
    %196 = vmatpush1.msra.mxu0 0.0
    %197 = vmatprep.mubr.f32.mxu0 0.0
    %198 = vmatmul.mubr.f32.gmra.mrb[0].mxu0 %v131
    %v199 = vpop.f32.mrb[0].mxu0
    %v200 = vadd.f32 %v127, %v199
    %v201 = vpop.f32.mrb[0].mxu0
    %202 = vdwg.mxu0
    %vm203 = vcmp.gt.f32.partialorder %v200, 0.0
    %v204 = vmul.f32 %v200, 0.01
    %v205 = vsel %vm203, %v200, %v204
    %v206 = vld [vmem:[%s3] sm:$0xff]
    %v207 = vld [vmem:[%s3 + $0x8] sm:$0xff]
    %v208 = vld [vmem:[%s3 + $0x10] sm:$0xff]
    %v209 = vld [vmem:[%s3 + $0x18] sm:$0xff]
    %v210 = vld [vmem:[%s6] sm:$0x1]
    %v212 = vlaneseq
    %v213 = vshrl.u32 %v212, 7
    %v214 = vsub.s32 0, %v213
    %v215 = vrot.slane %v210, %v214
    %vm217 = vcmask 261120
    %v219 = vsel %vm217, %v205, 0
    %221 = vmatprep.subr.mxu0 0.0
    %222 = vmatpush1.msra.mxu0 %v206
    %223 = vmatprep.subr.mxu0 0.0
    %224 = vmatpush1.msra.mxu0 %v207
    %225 = vmatprep.subr.mxu0 0.0
    %226 = vmatpush1.msra.mxu0 %v208
    %227 = vmatprep.subr.mxu0 0.0
    %228 = vmatpush1.msra.mxu0 %v209
    %229 = vmatprep.subr.mxu0 0.0
    %230 = vmatpush1.msra.mxu0 0.0
    %231 = vmatprep.subr.mxu0 0.0
    %232 = vmatpush1.msra.mxu0 0.0
    %233 = vmatprep.subr.mxu0 0.0
    %234 = vmatpush1.msra.mxu0 0.0
    %235 = vmatprep.subr.mxu0 0.0
    %236 = vmatpush1.msra.mxu0 0.0
    %237 = vmatprep.subr.mxu0 0.0
    %238 = vmatpush1.msra.mxu0 0.0
    %239 = vmatprep.subr.mxu0 0.0
    %240 = vmatpush1.msra.mxu0 0.0
    %241 = vmatprep.subr.mxu0 0.0
    %242 = vmatpush1.msra.mxu0 0.0
    %243 = vmatprep.subr.mxu0 0.0
    %244 = vmatpush1.msra.mxu0 0.0
    %245 = vmatprep.subr.mxu0 0.0
    %246 = vmatpush1.msra.mxu0 0.0
    %247 = vmatprep.subr.mxu0 0.0
    %248 = vmatpush1.msra.mxu0 0.0
    %249 = vmatprep.subr.mxu0 0.0
    %250 = vmatpush1.msra.mxu0 0.0
    %251 = vmatprep.subr.mxu0 0.0
    %252 = vmatpush1.msra.mxu0 0.0
    %253 = vmatprep.subr.mxu0 0.0
    %254 = vmatpush1.msra.mxu0 0.0
    %255 = vmatprep.subr.mxu0 0.0
    %256 = vmatpush1.msra.mxu0 0.0
    %257 = vmatprep.subr.mxu0 0.0
    %258 = vmatpush1.msra.mxu0 0.0
    %259 = vmatprep.subr.mxu0 0.0
    %260 = vmatpush1.msra.mxu0 0.0
    %261 = vmatprep.subr.mxu0 0.0
    %262 = vmatpush1.msra.mxu0 0.0
    %263 = vmatprep.subr.mxu0 0.0
    %264 = vmatpush1.msra.mxu0 0.0
    %265 = vmatprep.subr.mxu0 0.0
    %266 = vmatpush1.msra.mxu0 0.0
    %267 = vmatprep.subr.mxu0 0.0
    %268 = vmatpush1.msra.mxu0 0.0
    %269 = vmatprep.subr.mxu0 0.0
    %270 = vmatpush1.msra.mxu0 0.0
    %271 = vmatprep.subr.mxu0 0.0
    %272 = vmatpush1.msra.mxu0 0.0
    %273 = vmatprep.subr.mxu0 0.0
    %274 = vmatpush1.msra.mxu0 0.0
    %275 = vmatprep.subr.mxu0 0.0
    %276 = vmatpush1.msra.mxu0 0.0
    %277 = vmatprep.subr.mxu0 0.0
    %278 = vmatpush1.msra.mxu0 0.0
    %279 = vmatprep.subr.mxu0 0.0
    %280 = vmatpush1.msra.mxu0 0.0
    %281 = vmatprep.subr.mxu0 0.0
    %282 = vmatpush1.msra.mxu0 0.0
    %283 = vmatprep.subr.mxu0 0.0
    %284 = vmatpush1.msra.mxu0 0.0
    %285 = vmatprep.mubr.f32.mxu0 0.0
    %286 = vmatmul.mubr.f32.gmra.mrb[0].mxu0 %v219
    %v287 = vpop.f32.mrb[0].mxu0
    %v288 = vadd.f32 %v215, %v287
    %v289 = vpop.f32.mrb[0].mxu0
    %290 = vdwg.mxu0
    %vm291 = vcmask 64512
    %v292 = vsel %vm291, %v288, -inf
    %293 = vmax.xlane.f32.xlu0 %v292
    %v294 = vpop.xlane.xlu0 %293
    %v295 = vsub.f32 %v288, %v294
    %v296 = vmul.f32 %v295, 1.442695
    %v297 = vpow.pop %v296
    %v298 = vsel %vm291, %v297, 0.0
    %299 = vadd.xlane.f32.xlu0 %v298
    %v300 = vpop.xlane.xlu0 %299
    %v301 = vrcp.pop %v300
    %v302 = vmul.f32 %v300, %v301
    %v303 = vsub.f32 2.0, %v302
    %v304 = vmul.f32 %v301, %v303
    %v305 = vmul.f32 %v297, %v304
    %306 = vst.msk [vmem:[#allocation2] sm:$0xff] %vm291, %v305
    // Predicated region
    $region30: #{tpu_custom_call.1} parent=1 // pred_check
      _
    $region31: #{tpu_custom_call.1} parent=1 // pred_check_branch
      %308 = sbr.rel (0) target = $region33
    $region32: #{tpu_custom_call.1} parent=1 // pred_region
      %s310 = ssub.s32 128, 128
      %311 = vsyncadd [#allocation3], %s310
      %s313 = sshll.u32 [#allocation2], 4
      %s314 = int_to_ptr.vmem [resolvable:$true] %s313
      %316 = dma.vmem_to_hbm [thread:$0]  %s314, 128, %s7, [#allocation3]
    $region33: #{tpu_custom_call.1} parent=1 // pred_fallthru
      _
    // Predicated region
    $region34: #{tpu_custom_call.1} parent=1 // pred_check
      _
    $region35: #{tpu_custom_call.1} parent=1 // pred_check_branch
      %318 = sbr.rel (0) target = $region37
    $region36: #{tpu_custom_call.1} parent=1 // pred_region
      %319 = dma.done [#allocation3], 128
    $region37: #{tpu_custom_call.1} parent=1 // pred_fallthru
      _
    %320 = vsyncpa [#allocation3], 1

</llo_original>
